<compile_context>
chip_gen: v5e
topology: v5e:2x2
jax: 0.10.0
libtpu: 0.0.40
codegen_flags: <defaults>
</compile_context>

<pallas_src>
import jax
import jax.numpy as jnp
from jax import lax
from jax.experimental import pallas as pl
from jax.experimental.pallas import tpu as pltpu


def _round_up(x, m):
    return ((x + m - 1) // m) * m


def _svd_linear_kernel(x_ref, v_ref, s_ref, u_ref, b_ref, o_ref, xv_ref):
    """y_tile = ((x @ V) * S) @ U_tile^T + bias_tile  (re-associated low-rank linear).

    x:  (tm, in_p)   M tile of the input, full in_f (padded)
    V:  (in_p, r_p)  whole right factor
    S:  (1, r_p)     singular values (padded with zeros)
    U:  (tn, r_p)    N tile of the left factor
    b:  (1, tn)      N tile of the bias
    o:  (tm, tn)     output tile
    xv: (tm, r_p)    f32 scratch holding (x @ V) * S, reused across N tiles
    """
    j = pl.program_id(1)

    # (x @ V) * S only depends on the M tile; compute it once (at the first N tile)
    # and reuse it for every N tile of this M tile.
    @pl.when(j == 0)
    def _():
        xv = lax.dot_general(
            x_ref[...], v_ref[...],
            dimension_numbers=(((1,), (0,)), ((), ())),
            preferred_element_type=jnp.float32)
        xv_ref[...] = xv * s_ref[...]

    # Contract on the rank axis of both operands (no explicit .T / relayout).
    y = lax.dot_general(
        xv_ref[...].astype(u_ref.dtype), u_ref[...],
        dimension_numbers=(((1,), (1,)), ((), ())),
        preferred_element_type=jnp.float32)
    o_ref[...] = (y + b_ref[...]).astype(o_ref.dtype)


def grad_svd_linear_forward(inp, weight, scale, bias, rank, operand_dtype=jnp.float32):
    """Forward pass of GradSVDLinear. Set operand_dtype=jnp.bfloat16 on v6e/v7x for
    bf16 MXU operands with f32 accumulation (accumulator stays f32 either way)."""
    out_f, in_f = weight.shape
    B = inp.shape[0]

    # ---- parameter setup (plain JAX; XLA fuses the broadcast multiply into SVD prep) --
    w = weight.astype(jnp.float32) * scale.reshape(1, -1).astype(jnp.float32)

    # TODO(synk): torch.svd_lowrank is a randomized SVD with no Pallas equivalent;
    #             exact truncated SVD via jnp.linalg.svd is used (same reconstruction
    #             up to SVD accuracy / sign conventions).
    U, S, Vh = jnp.linalg.svd(w, full_matrices=False)
    r = int(min(rank, min(out_f, in_f)))
    U = U[:, :r]                        # (out_f, r)
    S = S[:r]                           # (r,)
    V = jnp.swapaxes(Vh[:r, :], 0, 1)   # (in_f, r)

    if bias is None:
        bias = jnp.zeros((out_f,), jnp.float32)

    # ---- pad to TPU-friendly shapes: lane-dense output, (8,128)-aligned operands -----
    in_p = _round_up(in_f, 128)             # K of first matmul (kept whole per M tile)
    r_p = _round_up(r, 128)                 # rank contraction, padded with zeros
    tm = min(_round_up(B, 8), 128)          # M tile
    B_p = _round_up(B, tm)
    out_128 = _round_up(out_f, 128)
    tn = 256 if out_128 >= 256 else out_128  # N tile (256-multiples when possible)
    out_p = _round_up(out_f, tn)

    f32 = jnp.float32
    x_p = jnp.zeros((B_p, in_p), operand_dtype).at[:B, :in_f].set(inp.astype(operand_dtype))
    V_p = jnp.zeros((in_p, r_p), operand_dtype).at[:in_f, :r].set(V.astype(operand_dtype))
    S_p = jnp.zeros((1, r_p), f32).at[0, :r].set(S.astype(f32))
    U_p = jnp.zeros((out_p, r_p), operand_dtype).at[:out_f, :r].set(U.astype(operand_dtype))
    b_p = jnp.zeros((1, out_p), f32).at[0, :out_f].set(bias.astype(f32))

    grid = (B_p // tm, out_p // tn)

    cost = pl.CostEstimate(
        flops=2 * B_p * in_p * r_p + 2 * B_p * r_p * out_p,
        transcendentals=0,
        bytes_accessed=4 * (B_p * in_p + in_p * r_p + r_p
                            + out_p * r_p + out_p + B_p * out_p),
    )

    y_p = pl.pallas_call(
        _svd_linear_kernel,
        out_shape=jax.ShapeDtypeStruct((B_p, out_p), jnp.float32),
        grid_spec=pltpu.PrefetchScalarGridSpec(
            num_scalar_prefetch=0,
            grid=grid,
            in_specs=[
                pl.BlockSpec((tm, in_p), lambda i, j: (i, 0)),    # x: M tile, full K
                pl.BlockSpec((in_p, r_p), lambda i, j: (0, 0)),   # V: whole
                pl.BlockSpec((1, r_p), lambda i, j: (0, 0)),      # S
                pl.BlockSpec((tn, r_p), lambda i, j: (j, 0)),     # U: N tile
                pl.BlockSpec((1, tn), lambda i, j: (0, j)),       # bias: N tile
            ],
            out_specs=pl.BlockSpec((tm, tn), lambda i, j: (i, j)),
            scratch_shapes=[pltpu.VMEM((tm, r_p), jnp.float32)],  # (x@V)*S, reused over N
        ),
        compiler_params=pltpu.CompilerParams(
            dimension_semantics=("parallel", "arbitrary"),
        ),
        cost_estimate=cost,
    )(x_p, V_p, S_p, U_p, b_p)

    return y_p[:B, :out_f]


if __name__ == "__main__":
    # Small deterministic setup consistent with the module:
    #   linear with in_features=32, out_features=32, batch=8, rank=4
    in_features = 32
    out_features = 32
    batch = 8
    rank = 4

    key = jax.random.PRNGKey(0)
    k_w, k_s, k_b, k_x = jax.random.split(key, 4)

    weight = jax.random.normal(k_w, (out_features, in_features), dtype=jnp.float32) * 0.1
    scale = jax.random.uniform(k_s, (in_features,), dtype=jnp.float32, minval=0.5, maxval=1.5)
    bias = jax.random.normal(k_b, (out_features,), dtype=jnp.float32) * 0.01
    inp = jax.random.normal(k_x, (batch, in_features), dtype=jnp.float32)

    y = grad_svd_linear_forward(inp, weight, scale, bias, rank)
    y = jax.block_until_ready(y)
    assert y.shape == (batch, out_features)

    # Reference (plain JAX, same math as the module with exact truncated SVD).
    w_ref = weight * scale[None, :]
    U_r, S_r, Vh_r = jnp.linalg.svd(w_ref, full_matrices=False)
    new_w = (U_r[:, :rank] * S_r[:rank]) @ Vh_r[:rank, :]
    y_ref = inp @ new_w.T + bias[None, :]
    err = float(jnp.max(jnp.abs(y - y_ref)))
    assert jnp.allclose(y, y_ref, rtol=1e-4, atol=1e-4), f"max abs err {err}"

    print("KERNEL_OK")
</pallas_src>

<mosaic_0001>
module attributes {stable_mosaic.version = 11 : i64} {
  func.func @_svd_linear_kernel(%arg0: i32, %arg1: i32, %arg2: memref<8x128xf32, #tpu.memory_space<vmem>>, %arg3: memref<128x128xf32, #tpu.memory_space<vmem>>, %arg4: memref<1x128xf32, #tpu.memory_space<vmem>>, %arg5: memref<128x128xf32, #tpu.memory_space<vmem>>, %arg6: memref<1x128xf32, #tpu.memory_space<vmem>>, %arg7: memref<8x128xf32, #tpu.memory_space<vmem>>, %arg8: memref<8x128xf32, #tpu.memory_space<vmem>>) attributes {dimension_semantics = [#tpu.dimension_semantics<parallel>, #tpu.dimension_semantics<arbitrary>], iteration_bounds = array<i64: 1, 1>, scalar_prefetch = 0 : i64, scratch_operands = 1 : i64, tpu.core_type = #tpu.core_type<tc>, window_params = [{transform_indices = @transform_0, window_bounds = array<i64: 8, 128>}, {pipeline_mode = #tpu.pipeline_mode<synchronous>, transform_indices = @transform_1, window_bounds = array<i64: 128, 128>}, {pipeline_mode = #tpu.pipeline_mode<synchronous>, transform_indices = @transform_2, window_bounds = array<i64: 1, 128>}, {transform_indices = @transform_3, window_bounds = array<i64: 128, 128>}, {transform_indices = @transform_4, window_bounds = array<i64: 1, 128>}, {transform_indices = @transform_5, window_bounds = array<i64: 8, 128>}]} {
    %c0_i32 = arith.constant 0 : i32
    %0 = arith.cmpi eq, %arg1, %c0_i32 : i32
    %1 = arith.extui %0 : i1 to i32
    %c0_i32_0 = arith.constant 0 : i32
    %2 = arith.cmpi ne, %1, %c0_i32_0 : i32
    scf.if %2 {
      %c0_8 = arith.constant 0 : index
      %c0_9 = arith.constant 0 : index
      %10 = vector.load %arg2[%c0_8, %c0_9] : memref<8x128xf32, #tpu.memory_space<vmem>>, vector<8x128xf32>
      %c0_10 = arith.constant 0 : index
      %c0_11 = arith.constant 0 : index
      %11 = vector.load %arg3[%c0_10, %c0_11] : memref<128x128xf32, #tpu.memory_space<vmem>>, vector<128x128xf32>
      %cst_12 = arith.constant dense<0.000000e+00> : vector<8x128xf32>
      %12 = tpu.matmul %10, %11, %cst_12 {dimension_numbers = #tpu.dot_dimension_numbers<[1], [0], [0], [1], [0, 0, 1, 1], [], []>} : vector<8x128xf32>, vector<128x128xf32>, vector<8x128xf32> -> vector<8x128xf32>
      %c0_13 = arith.constant 0 : index
      %c0_14 = arith.constant 0 : index
      %13 = vector.load %arg4[%c0_13, %c0_14] : memref<1x128xf32, #tpu.memory_space<vmem>>, vector<1x128xf32>
      %14 = vector.broadcast %13 : vector<1x128xf32> to vector<8x128xf32>
      %15 = arith.mulf %12, %14 : vector<8x128xf32>
      %c0_15 = arith.constant 0 : index
      %c0_16 = arith.constant 0 : index
      %16 = vector.load %arg8[%c0_15, %c0_16] : memref<8x128xf32, #tpu.memory_space<vmem>>, vector<8x128xf32>
      tpu.vector_store %arg8[%c0_15, %c0_16], %15 {strides = array<i32>} : memref<8x128xf32, #tpu.memory_space<vmem>>, vector<8x128xf32>,
    } else {
    }
    %c0 = arith.constant 0 : index
    %c0_1 = arith.constant 0 : index
    %3 = vector.load %arg8[%c0, %c0_1] : memref<8x128xf32, #tpu.memory_space<vmem>>, vector<8x128xf32>
    %c0_2 = arith.constant 0 : index
    %c0_3 = arith.constant 0 : index
    %4 = vector.load %arg5[%c0_2, %c0_3] : memref<128x128xf32, #tpu.memory_space<vmem>>, vector<128x128xf32>
    %cst = arith.constant dense<0.000000e+00> : vector<8x128xf32>
    %5 = tpu.matmul %3, %4, %cst {dimension_numbers = #tpu.dot_dimension_numbers<[1], [1], [0], [0], [0, 0, 1, 0], [], []>} : vector<8x128xf32>, vector<128x128xf32>, vector<8x128xf32> -> vector<8x128xf32>
    %c0_4 = arith.constant 0 : index
    %c0_5 = arith.constant 0 : index
    %6 = vector.load %arg6[%c0_4, %c0_5] : memref<1x128xf32, #tpu.memory_space<vmem>>, vector<1x128xf32>
    %7 = vector.broadcast %6 : vector<1x128xf32> to vector<8x128xf32>
    %8 = arith.addf %5, %7 : vector<8x128xf32>
    %c0_6 = arith.constant 0 : index
    %c0_7 = arith.constant 0 : index
    %9 = vector.load %arg7[%c0_6, %c0_7] : memref<8x128xf32, #tpu.memory_space<vmem>>, vector<8x128xf32>
    tpu.vector_store %arg7[%c0_6, %c0_7], %8 {strides = array<i32>} : memref<8x128xf32, #tpu.memory_space<vmem>>, vector<8x128xf32>,
    return
  }
  func.func @transform_0(%arg0: i32, %arg1: i32) -> (i32, i32) {
    %c0_i32 = arith.constant 0 : i32
    %c0_i32_0 = arith.constant 0 : i32
    return %arg0, %c0_i32 : i32, i32
  }
  func.func @transform_1(%arg0: i32, %arg1: i32) -> (i32, i32) {
    %c0_i32 = arith.constant 0 : i32
    %c0_i32_0 = arith.constant 0 : i32
    %c0_i32_1 = arith.constant 0 : i32
    return %c0_i32, %c0_i32_0 : i32, i32
  }
  func.func @transform_2(%arg0: i32, %arg1: i32) -> (i32, i32) {
    %c0_i32 = arith.constant 0 : i32
    %c0_i32_0 = arith.constant 0 : i32
    %c0_i32_1 = arith.constant 0 : i32
    return %c0_i32, %c0_i32_0 : i32, i32
  }
  func.func @transform_3(%arg0: i32, %arg1: i32) -> (i32, i32) {
    %c0_i32 = arith.constant 0 : i32
    %c0_i32_0 = arith.constant 0 : i32
    return %arg1, %c0_i32 : i32, i32
  }
  func.func @transform_4(%arg0: i32, %arg1: i32) -> (i32, i32) {
    %c0_i32 = arith.constant 0 : i32
    %c0_i32_0 = arith.constant 0 : i32
    return %c0_i32, %arg1 : i32, i32
  }
  func.func @transform_5(%arg0: i32, %arg1: i32) -> (i32, i32) {
    %c0_i32 = arith.constant 0 : i32
    return %arg0, %arg1 : i32, i32
  }
}

</mosaic_0001>

<llo_original>
// kernel: tpu_custom_call.1
$region0: #{tpu_custom_call.1}
  #allocation0 [shape = 'u32[]', space=smem, size = 0x4, offset = 0x4, fixed_abs, tag = 'smem constant byte address 0x4 - core index']
  #allocation1 [shape = 'u32[72,128]{1,0:T(1,128)}', space=vmem, size = 0x9000, scoped, tag = 'internal scratch']
  #allocation2 [shape = 'f32[8,128]{1,0:T(8,128)}', space=vmem, size = 0x1000, scoped, tag = 'scratch operand']
  %s0 = inlined_call_operand.hbm [shape: f32[8,128], index: 0, kind: input, shape index: {}]
  %s1 = inlined_call_operand.hbm [shape: f32[128,128], index: 1, kind: input, shape index: {}]
  %s2 = inlined_call_operand.vmem [shape: f32[1,128], index: 2, kind: input, shape index: {}]
  %s3 = inlined_call_operand.hbm [shape: f32[128,128], index: 3, kind: input, shape index: {}]
  %s4 = inlined_call_operand.vmem [shape: f32[1,128], index: 4, kind: input, shape index: {}]
  %s5 = inlined_call_operand.hbm [shape: f32[8,128], index: 5, kind: output, shape index: {}]
  %s6 = sld [smem:[#allocation0]]
  $region46: #{tpu_custom_call.1} parent=0
    _
  %s8 = ssub.s32 1, %s6
  %s9 = scalar_select 0, %s8, %s6
  $region1: #{tpu_custom_call.1} parent=0
    #allocation3 [shape = 'u8[4096]{0}', space=vmem, size = 0x1000, scoped, tag = 'input window, operand 0, single buffered']
    #allocation4 [shape = 's32[1]{0}', space=sflag, size = 0x4, scoped, tag = 'scoped memory for tpu_custom_call.1']
    #allocation5 [shape = 's32[1]{0}', space=sflag, size = 0x4, scoped, tag = 'scoped memory for tpu_custom_call.1']
    #allocation6 [shape = 'u8[65536]{0}', space=vmem, size = 0x10000, scoped, tag = 'input window, operand 1, single buffered']
    #allocation7 [shape = 's32[1]{0}', space=sflag, size = 0x4, scoped, tag = 'scoped memory for tpu_custom_call.1']
    #allocation8 [shape = 'u8[65536]{0}', space=vmem, size = 0x10000, scoped, tag = 'input window, operand 3, single buffered']
    #allocation9 [shape = 'u8[4096]{0}', space=vmem, size = 0x1000, scoped, tag = 'output window, operand 0, single buffered']
    %10 = vsyncpa [#allocation4], 0
    %11 = vsyncpa [#allocation7], 0
    %12 = vsyncpa [#allocation5], 0
    // Predicated region
    $region2: #{tpu_custom_call.1} parent=1 // pred_check
      _
    $region3: #{tpu_custom_call.1} parent=1 // pred_check_branch
      %14 = sbr.rel (0) target = $region5
    $region4: #{tpu_custom_call.1} parent=1 // pred_region
      %16 = vsyncadd [#allocation4], 0
      %s18 = sshll.u32 %s0, 4
      %s19 = int_to_ptr.hbm [resolvable:$true] %s18
      %s20 = sshll.u32 [#allocation3], 4
      %s21 = int_to_ptr.vmem [resolvable:$true] %s20
      %23 = dma.hbm_to_vmem [thread:$0]  %s19, 128, %s21, [#allocation4]
    $region5: #{tpu_custom_call.1} parent=1 // pred_fallthru
      _
    // Predicated region
    $region6: #{tpu_custom_call.1} parent=1 // pred_check
      _
    $region7: #{tpu_custom_call.1} parent=1 // pred_check_branch
      %25 = sbr.rel (0) target = $region9
    $region8: #{tpu_custom_call.1} parent=1 // pred_region
      %27 = vsyncadd [#allocation7], 0
      %s28 = sshll.u32 %s1, 4
      %s29 = int_to_ptr.hbm [resolvable:$true] %s28
      %s30 = sshll.u32 [#allocation6], 4
      %s31 = int_to_ptr.vmem [resolvable:$true] %s30
      %36 = dma.hbm_to_vmem [thread:$0]  %s29, 2048, %s31, [#allocation7], 128, 128, 8
    $region9: #{tpu_custom_call.1} parent=1 // pred_fallthru
      _
    // Predicated region
    $region10: #{tpu_custom_call.1} parent=1 // pred_check
      _
    $region11: #{tpu_custom_call.1} parent=1 // pred_check_branch
      %38 = sbr.rel (0) target = $region13
    $region12: #{tpu_custom_call.1} parent=1 // pred_region
      _
    $region13: #{tpu_custom_call.1} parent=1 // pred_fallthru
      _
    // Predicated region
    $region14: #{tpu_custom_call.1} parent=1 // pred_check
      _
    $region15: #{tpu_custom_call.1} parent=1 // pred_check_branch
      %40 = sbr.rel (0) target = $region17
    $region16: #{tpu_custom_call.1} parent=1 // pred_region
      %42 = vsyncadd [#allocation7], 0
      %s43 = sshll.u32 %s3, 4
      %s44 = int_to_ptr.hbm [resolvable:$true] %s43
      %s45 = sshll.u32 [#allocation8], 4
      %s46 = int_to_ptr.vmem [resolvable:$true] %s45
      %51 = dma.hbm_to_vmem [thread:$0]  %s44, 2048, %s46, [#allocation7], 128, 128, 8
    $region17: #{tpu_custom_call.1} parent=1 // pred_fallthru
      _
    // Predicated region
    $region18: #{tpu_custom_call.1} parent=1 // pred_check
      _
    $region19: #{tpu_custom_call.1} parent=1 // pred_check_branch
      %53 = sbr.rel (0) target = $region21
    $region20: #{tpu_custom_call.1} parent=1 // pred_region
      _
    $region21: #{tpu_custom_call.1} parent=1 // pred_fallthru
      _
    // Predicated region
    $region22: #{tpu_custom_call.1} parent=1 // pred_check
      _
    $region23: #{tpu_custom_call.1} parent=1 // pred_check_branch
      %55 = sbr.rel (0) target = $region25
    $region24: #{tpu_custom_call.1} parent=1 // pred_region
      %57 = dma.done [#allocation4], 128
    $region25: #{tpu_custom_call.1} parent=1 // pred_fallthru
      _
    // Predicated region
    $region26: #{tpu_custom_call.1} parent=1 // pred_check
      _
    $region27: #{tpu_custom_call.1} parent=1 // pred_check_branch
      %59 = sbr.rel (0) target = $region29
    $region28: #{tpu_custom_call.1} parent=1 // pred_region
      %61 = dma.done [#allocation7], 2048
    $region29: #{tpu_custom_call.1} parent=1 // pred_fallthru
      _
    // Predicated region
    $region30: #{tpu_custom_call.1} parent=1 // pred_check
      _
    $region31: #{tpu_custom_call.1} parent=1 // pred_check_branch
      %63 = sbr.rel (0) target = $region33
    $region32: #{tpu_custom_call.1} parent=1 // pred_region
      %65 = dma.done [#allocation7], 2048
    $region33: #{tpu_custom_call.1} parent=1 // pred_fallthru
      _
    %p66 = scmp.eq.s32.totalorder 0, 0
    // Predicated region
    $region34: #{tpu_custom_call.1} parent=1 // pred_check
      %p67 = pneg %p66
    $region35: #{tpu_custom_call.1} parent=1 // pred_check_branch
      %69 = sbr.rel (%p67) target = $region37
    $region36: #{tpu_custom_call.1} parent=1 // pred_region
      %v70 = vld [vmem:[#allocation3] sm:$0xff]
      %v71 = vld [vmem:[#allocation6] sm:$0xff]
      %v72 = vld [vmem:[#allocation6 + $0x8] sm:$0xff]
      %v73 = vld [vmem:[#allocation6 + $0x10] sm:$0xff]
      %v74 = vld [vmem:[#allocation6 + $0x18] sm:$0xff]
      %v75 = vld [vmem:[#allocation6 + $0x20] sm:$0xff]
      %v76 = vld [vmem:[#allocation6 + $0x28] sm:$0xff]
      %v77 = vld [vmem:[#allocation6 + $0x30] sm:$0xff]
      %v78 = vld [vmem:[#allocation6 + $0x38] sm:$0xff]
      %v79 = vld [vmem:[#allocation6 + $0x40] sm:$0xff]
      %v80 = vld [vmem:[#allocation6 + $0x48] sm:$0xff]
      %v81 = vld [vmem:[#allocation6 + $0x50] sm:$0xff]
      %v82 = vld [vmem:[#allocation6 + $0x58] sm:$0xff]
      %v83 = vld [vmem:[#allocation6 + $0x60] sm:$0xff]
      %v84 = vld [vmem:[#allocation6 + $0x68] sm:$0xff]
      %v85 = vld [vmem:[#allocation6 + $0x70] sm:$0xff]
      %v86 = vld [vmem:[#allocation6 + $0x78] sm:$0xff]
      %87 = vmatpush.msra.mxu0 %v86
      %88 = vmatpush.msra.mxu0 %v85
      %89 = vmatpush.msra.mxu0 %v84
      %90 = vmatpush.msra.mxu0 %v83
      %91 = vmatpush.msra.mxu0 %v82
      %92 = vmatpush.msra.mxu0 %v81
      %93 = vmatpush.msra.mxu0 %v80
      %94 = vmatpush.msra.mxu0 %v79
      %95 = vmatpush.msra.mxu0 %v78
      %96 = vmatpush.msra.mxu0 %v77
      %97 = vmatpush.msra.mxu0 %v76
      %98 = vmatpush.msra.mxu0 %v75
      %99 = vmatpush.msra.mxu0 %v74
      %100 = vmatpush.msra.mxu0 %v73
      %101 = vmatpush.msra.mxu0 %v72
      %102 = vmatpush.msra.mxu0 %v71
      %103 = vmatmul.f32.gmra.mxu0 %v70
      %v104 = vpop.f32.mrf.mxu0
      %v105 = vadd.f32 0.0, %v104
      %106 = vdwg.mxu0
      %v107 = vld [vmem:[%s2] sm:$0x1]
      %v109 = vperm.slane %v107, 0
      %v111 = vmul.f32 %v105, %v109
      %112 = vst [vmem:[#allocation2] sm:$0xff] %v111
    $region37: #{tpu_custom_call.1} parent=1 // pred_fallthru
      _
    %v113 = vld [vmem:[#allocation2] sm:$0xff]
    %v114 = vld [vmem:[#allocation8] sm:$0xff]
    %v115 = vld [vmem:[#allocation8 + $0x8] sm:$0xff]
    %v116 = vld [vmem:[#allocation8 + $0x10] sm:$0xff]
    %v117 = vld [vmem:[#allocation8 + $0x18] sm:$0xff]
    %v118 = vld [vmem:[#allocation8 + $0x20] sm:$0xff]
    %v119 = vld [vmem:[#allocation8 + $0x28] sm:$0xff]
    %v120 = vld [vmem:[#allocation8 + $0x30] sm:$0xff]
    %v121 = vld [vmem:[#allocation8 + $0x38] sm:$0xff]
    %v122 = vld [vmem:[#allocation8 + $0x40] sm:$0xff]
    %v123 = vld [vmem:[#allocation8 + $0x48] sm:$0xff]
    %v124 = vld [vmem:[#allocation8 + $0x50] sm:$0xff]
    %v125 = vld [vmem:[#allocation8 + $0x58] sm:$0xff]
    %v126 = vld [vmem:[#allocation8 + $0x60] sm:$0xff]
    %v127 = vld [vmem:[#allocation8 + $0x68] sm:$0xff]
    %v128 = vld [vmem:[#allocation8 + $0x70] sm:$0xff]
    %v129 = vld [vmem:[#allocation8 + $0x78] sm:$0xff]
    %v130 = vld [vmem:[%s4] sm:$0x1]
    %v132 = vperm.slane %v130, 0
    %134 = vmatpush.xpose.msra.mxu0 %v129
    %135 = vmatpush.xpose.msra.mxu0 %v128
    %136 = vmatpush.xpose.msra.mxu0 %v127
    %137 = vmatpush.xpose.msra.mxu0 %v126
    %138 = vmatpush.xpose.msra.mxu0 %v125
    %139 = vmatpush.xpose.msra.mxu0 %v124
    %140 = vmatpush.xpose.msra.mxu0 %v123
    %141 = vmatpush.xpose.msra.mxu0 %v122
    %142 = vmatpush.xpose.msra.mxu0 %v121
    %143 = vmatpush.xpose.msra.mxu0 %v120
    %144 = vmatpush.xpose.msra.mxu0 %v119
    %145 = vmatpush.xpose.msra.mxu0 %v118
    %146 = vmatpush.xpose.msra.mxu0 %v117
    %147 = vmatpush.xpose.msra.mxu0 %v116
    %148 = vmatpush.xpose.msra.mxu0 %v115
    %149 = vmatpush.xpose.msra.mxu0 %v114
    %150 = vmatmul.f32.gmra.mxu0 %v113
    %v151 = vpop.f32.mrf.mxu0
    %v152 = vadd.f32 %v132, %v151
    %153 = vdwg.mxu0
    %154 = vst [vmem:[#allocation9] sm:$0xff] %v152
    // Predicated region
    $region38: #{tpu_custom_call.1} parent=1 // pred_check
      _
    $region39: #{tpu_custom_call.1} parent=1 // pred_check_branch
      %156 = sbr.rel (0) target = $region41
    $region40: #{tpu_custom_call.1} parent=1 // pred_region
      %158 = vsyncadd [#allocation5], 0
      %s160 = sshll.u32 [#allocation9], 4
      %s161 = int_to_ptr.vmem [resolvable:$true] %s160
      %s162 = sshll.u32 %s5, 4
      %s163 = int_to_ptr.hbm [resolvable:$true] %s162
      %165 = dma.vmem_to_hbm [thread:$0]  %s161, 128, %s163, [#allocation5]
    $region41: #{tpu_custom_call.1} parent=1 // pred_fallthru
      _
    // Predicated region
    $region42: #{tpu_custom_call.1} parent=1 // pred_check
      _
    $region43: #{tpu_custom_call.1} parent=1 // pred_check_branch
      %167 = sbr.rel (0) target = $region45
    $region44: #{tpu_custom_call.1} parent=1 // pred_region
      %169 = dma.done [#allocation5], 128
    $region45: #{tpu_custom_call.1} parent=1 // pred_fallthru
      _
    %170 = vsyncpa [#allocation4], 1
    %171 = vsyncpa [#allocation7], 1
    %172 = vsyncpa [#allocation5], 1

</llo_original>
